<compile_context>
chip_gen: v7x
topology: tpu7x:2x2x1
jax: 0.10.0
libtpu: 0.0.40
codegen_flags: <defaults>
</compile_context>

<pallas_src>
import functools
import math

import jax
import jax.numpy as jnp
import numpy as np
from jax import lax
from jax.experimental import pallas as pl
from jax.experimental.pallas import tpu as pltpu


def _lut_quant_kernel(x_ref, levels_ref, out_ref, *, chunk):
    """One tile of groups: x (TG, N), levels (TG, L) -> out (TG, N).

    The 15-step compare/select chain is run per `chunk`-row slab so the live
    x / x_q values stay register-resident instead of making ~15 VMEM passes
    over the whole tile.
    """
    L = levels_ref.shape[-1]
    tg = x_ref.shape[0]
    n_chunks = tg // chunk

    def body(c, carry):
        r0 = c * chunk
        if not isinstance(r0, int):
            r0 = pl.multiple_of(r0, chunk)
        x = x_ref[pl.ds(r0, chunk), :]              # (chunk, N), native dtype
        lv = levels_ref[pl.ds(r0, chunk), :]        # (chunk, L)

        # Fused compare/select chain.  Assumes levels sorted ascending per
        # group (true for the linspace init); then this is exactly
        #   idx = sum_b (x > borders[:, b]);  x_q = levels[g, idx]
        x_q = jnp.broadcast_to(lv[:, 0:1], x.shape)
        for b in range(L - 1):                      # static unroll (L = 16)
            border = (lv[:, b:b + 1] + lv[:, b + 1:b + 2]) * 0.5
            x_q = jnp.where(x > border, lv[:, b + 1:b + 2], x_q)

        out_ref[pl.ds(r0, chunk), :] = x_q.astype(out_ref.dtype)
        return carry

    lax.fori_loop(0, n_chunks, body, 0, unroll=True)


def _pick_tile(G, N, dtype_bytes, *, min_steps=8, budget_bytes=2 << 20):
    """Rows per grid step.

    Multiple of 8 (32 when possible), byte-budgeted so the double-buffered
    x-in + out blocks stay ~<= 8 MiB total (safe under v7x's 32 MiB scoped
    VMEM default), and small enough to give >= min_steps grid steps when G
    allows (>= 4 steps per TensorCore on v7x megacore).
    """
    rq = 8
    cap = max(rq, (budget_bytes // max(1, N * dtype_bytes)) // rq * rq)
    if G >= min_steps * rq:
        steps_cap = max(rq, (G // min_steps) // rq * rq)
    else:
        steps_cap = rq
    g_cap = max(rq, -(-G // rq) * rq)               # G rounded up to 8
    tg = min(cap, steps_cap, g_cap)
    if tg >= 32:
        tg = tg // 32 * 32                          # enable 32-row chunks
    return tg


def lut_quantize(x, levels, group_size, *, tg=None):
    """Pallas implementation of QuantizerLUT.quantize for integer group_size."""
    x_shape = x.shape
    x_g = x.reshape(-1, group_size)                 # regroup: (G, group_size)
    G, N = x_g.shape
    L = levels.shape[-1]
    assert levels.shape[0] == G
    # TODO(synk): if group_size is not a multiple of 128 the output stores are
    #   lane-masked; pad/regroup in the wrapper if that case ever matters.

    if tg is None:
        tg = _pick_tile(G, N, x_g.dtype.itemsize)
    chunk = math.gcd(tg, 32)

    out = pl.pallas_call(
        functools.partial(_lut_quant_kernel, chunk=chunk),
        out_shape=jax.ShapeDtypeStruct((G, N), x.dtype),
        grid=(pl.cdiv(G, tg),),                     # no padding; Pallas masks
        in_specs=[
            pl.BlockSpec((tg, N), lambda i: (i, 0)),
            pl.BlockSpec((tg, L), lambda i: (i, 0)),
        ],
        out_specs=pl.BlockSpec((tg, N), lambda i: (i, 0)),
        compiler_params=pltpu.CompilerParams(
            dimension_semantics=("parallel",)),
    )(x_g, levels)

    return out.reshape(x_shape)


def init_levels(x, group_size, bit_width):
    """Deterministic levels init (matches _initialize before the Adam loop)."""
    x_g = x.reshape(-1, group_size)
    x_min = x_g.min(axis=-1, keepdims=True)
    x_max = x_g.max(axis=-1, keepdims=True)
    L = bit_width ** 2                       # matches the PyTorch module verbatim
    t = jnp.linspace(0.0, 1.0, L, dtype=x.dtype).reshape(1, -1)
    return x_min + (x_max - x_min) * t       # (G, L), sorted ascending per row


def lut_quantize_ref(x, levels, group_size):
    """Pure-JAX reference mirroring the PyTorch quantize() (counting form)."""
    x_shape = x.shape
    x_g = x.reshape(-1, group_size)
    borders = (levels[:, 1:] + levels[:, :-1]) / 2.0
    mask = x_g[:, :, None] > borders[:, None, :]
    indices = mask.sum(axis=2)
    x_q = jnp.take_along_axis(levels, indices, axis=1)
    return x_q.reshape(x_shape)


if __name__ == "__main__":
    # Module config (synthetic, deterministic)
    group_size = 128
    bit_width = 4          # -> L = 16 levels, 15 borders

    key = jax.random.PRNGKey(0)
    x = jax.random.normal(key, (2, 4, 16, 16), dtype=jnp.float32)  # NCHW

    levels = init_levels(x, group_size, bit_width)

    x_q = lut_quantize(x, levels, group_size)
    x_q = jax.block_until_ready(x_q)

    x_q_ref = lut_quantize_ref(x, levels, group_size)
    np.testing.assert_allclose(np.asarray(x_q), np.asarray(x_q_ref),
                               rtol=1e-6, atol=1e-6)

    print("KERNEL_OK")
</pallas_src>

<mosaic_0001>
module attributes {stable_mosaic.version = 11 : i64} {
  func.func @_lut_quant_kernel(%arg0: i32, %arg1: memref<8x128xf32, #tpu.memory_space<vmem>>, %arg2: memref<8x16xf32, #tpu.memory_space<vmem>>, %arg3: memref<8x128xf32, #tpu.memory_space<vmem>>) attributes {dimension_semantics = [#tpu.dimension_semantics<parallel>], iteration_bounds = array<i64: 2>, scalar_prefetch = 0 : i64, scratch_operands = 0 : i64, tpu.core_type = #tpu.core_type<tc>, window_params = [{transform_indices = @transform_0, window_bounds = array<i64: 8, 128>}, {transform_indices = @transform_1, window_bounds = array<i64: 8, 16>}, {transform_indices = @transform_2, window_bounds = array<i64: 8, 128>}]} {
    %c0_i32 = arith.constant 0 : i32
    %c8_i32 = arith.constant 8 : i32
    %0 = arith.muli %c0_i32, %c8_i32 : i32
    %1 = tpu.assume_multiple %0, 8 : i32
    %2 = arith.index_cast %1 : i32 to index
    %c0 = arith.constant 0 : index
    %3 = vector.load %arg1[%2, %c0] : memref<8x128xf32, #tpu.memory_space<vmem>>, vector<8x128xf32>
    %4 = arith.index_cast %1 : i32 to index
    %c0_0 = arith.constant 0 : index
    %5 = vector.load %arg2[%4, %c0_0] : memref<8x16xf32, #tpu.memory_space<vmem>>, vector<8x16xf32>
    %6 = vector.extract_strided_slice %5 {offsets = [0, 0], sizes = [8, 1], strides = [1, 1]} : vector<8x16xf32> to vector<8x1xf32>
    %7 = vector.shape_cast %6 : vector<8x1xf32> to vector<8x1xf32>
    %8 = vector.broadcast %7 : vector<8x1xf32> to vector<8x128xf32>
    %9 = vector.extract_strided_slice %5 {offsets = [0, 0], sizes = [8, 1], strides = [1, 1]} : vector<8x16xf32> to vector<8x1xf32>
    %10 = vector.extract_strided_slice %5 {offsets = [0, 1], sizes = [8, 1], strides = [1, 1]} : vector<8x16xf32> to vector<8x1xf32>
    %11 = arith.addf %9, %10 : vector<8x1xf32>
    %cst = arith.constant 5.000000e-01 : f32
    %12 = vector.broadcast %cst : f32 to vector<8x1xf32>
    %13 = arith.mulf %11, %12 : vector<8x1xf32>
    %14 = vector.broadcast %13 : vector<8x1xf32> to vector<8x128xf32>
    %15 = arith.cmpf ogt, %3, %14 : vector<8x128xf32>
    %16 = vector.extract_strided_slice %5 {offsets = [0, 1], sizes = [8, 1], strides = [1, 1]} : vector<8x16xf32> to vector<8x1xf32>
    %17 = vector.shape_cast %16 : vector<8x1xf32> to vector<8x1xf32>
    %18 = vector.broadcast %17 : vector<8x1xf32> to vector<8x128xf32>
    %19 = arith.select %15, %18, %8 : vector<8x128xi1>, vector<8x128xf32>
    %20 = vector.extract_strided_slice %5 {offsets = [0, 1], sizes = [8, 1], strides = [1, 1]} : vector<8x16xf32> to vector<8x1xf32>
    %21 = vector.extract_strided_slice %5 {offsets = [0, 2], sizes = [8, 1], strides = [1, 1]} : vector<8x16xf32> to vector<8x1xf32>
    %22 = arith.addf %20, %21 : vector<8x1xf32>
    %cst_1 = arith.constant 5.000000e-01 : f32
    %23 = vector.broadcast %cst_1 : f32 to vector<8x1xf32>
    %24 = arith.mulf %22, %23 : vector<8x1xf32>
    %25 = vector.broadcast %24 : vector<8x1xf32> to vector<8x128xf32>
    %26 = arith.cmpf ogt, %3, %25 : vector<8x128xf32>
    %27 = vector.extract_strided_slice %5 {offsets = [0, 2], sizes = [8, 1], strides = [1, 1]} : vector<8x16xf32> to vector<8x1xf32>
    %28 = vector.shape_cast %27 : vector<8x1xf32> to vector<8x1xf32>
    %29 = vector.broadcast %28 : vector<8x1xf32> to vector<8x128xf32>
    %30 = arith.select %26, %29, %19 : vector<8x128xi1>, vector<8x128xf32>
    %31 = vector.extract_strided_slice %5 {offsets = [0, 2], sizes = [8, 1], strides = [1, 1]} : vector<8x16xf32> to vector<8x1xf32>
    %32 = vector.extract_strided_slice %5 {offsets = [0, 3], sizes = [8, 1], strides = [1, 1]} : vector<8x16xf32> to vector<8x1xf32>
    %33 = arith.addf %31, %32 : vector<8x1xf32>
    %cst_2 = arith.constant 5.000000e-01 : f32
    %34 = vector.broadcast %cst_2 : f32 to vector<8x1xf32>
    %35 = arith.mulf %33, %34 : vector<8x1xf32>
    %36 = vector.broadcast %35 : vector<8x1xf32> to vector<8x128xf32>
    %37 = arith.cmpf ogt, %3, %36 : vector<8x128xf32>
    %38 = vector.extract_strided_slice %5 {offsets = [0, 3], sizes = [8, 1], strides = [1, 1]} : vector<8x16xf32> to vector<8x1xf32>
    %39 = vector.shape_cast %38 : vector<8x1xf32> to vector<8x1xf32>
    %40 = vector.broadcast %39 : vector<8x1xf32> to vector<8x128xf32>
    %41 = arith.select %37, %40, %30 : vector<8x128xi1>, vector<8x128xf32>
    %42 = vector.extract_strided_slice %5 {offsets = [0, 3], sizes = [8, 1], strides = [1, 1]} : vector<8x16xf32> to vector<8x1xf32>
    %43 = vector.extract_strided_slice %5 {offsets = [0, 4], sizes = [8, 1], strides = [1, 1]} : vector<8x16xf32> to vector<8x1xf32>
    %44 = arith.addf %42, %43 : vector<8x1xf32>
    %cst_3 = arith.constant 5.000000e-01 : f32
    %45 = vector.broadcast %cst_3 : f32 to vector<8x1xf32>
    %46 = arith.mulf %44, %45 : vector<8x1xf32>
    %47 = vector.broadcast %46 : vector<8x1xf32> to vector<8x128xf32>
    %48 = arith.cmpf ogt, %3, %47 : vector<8x128xf32>
    %49 = vector.extract_strided_slice %5 {offsets = [0, 4], sizes = [8, 1], strides = [1, 1]} : vector<8x16xf32> to vector<8x1xf32>
    %50 = vector.shape_cast %49 : vector<8x1xf32> to vector<8x1xf32>
    %51 = vector.broadcast %50 : vector<8x1xf32> to vector<8x128xf32>
    %52 = arith.select %48, %51, %41 : vector<8x128xi1>, vector<8x128xf32>
    %53 = vector.extract_strided_slice %5 {offsets = [0, 4], sizes = [8, 1], strides = [1, 1]} : vector<8x16xf32> to vector<8x1xf32>
    %54 = vector.extract_strided_slice %5 {offsets = [0, 5], sizes = [8, 1], strides = [1, 1]} : vector<8x16xf32> to vector<8x1xf32>
    %55 = arith.addf %53, %54 : vector<8x1xf32>
    %cst_4 = arith.constant 5.000000e-01 : f32
    %56 = vector.broadcast %cst_4 : f32 to vector<8x1xf32>
    %57 = arith.mulf %55, %56 : vector<8x1xf32>
    %58 = vector.broadcast %57 : vector<8x1xf32> to vector<8x128xf32>
    %59 = arith.cmpf ogt, %3, %58 : vector<8x128xf32>
    %60 = vector.extract_strided_slice %5 {offsets = [0, 5], sizes = [8, 1], strides = [1, 1]} : vector<8x16xf32> to vector<8x1xf32>
    %61 = vector.shape_cast %60 : vector<8x1xf32> to vector<8x1xf32>
    %62 = vector.broadcast %61 : vector<8x1xf32> to vector<8x128xf32>
    %63 = arith.select %59, %62, %52 : vector<8x128xi1>, vector<8x128xf32>
    %64 = vector.extract_strided_slice %5 {offsets = [0, 5], sizes = [8, 1], strides = [1, 1]} : vector<8x16xf32> to vector<8x1xf32>
    %65 = vector.extract_strided_slice %5 {offsets = [0, 6], sizes = [8, 1], strides = [1, 1]} : vector<8x16xf32> to vector<8x1xf32>
    %66 = arith.addf %64, %65 : vector<8x1xf32>
    %cst_5 = arith.constant 5.000000e-01 : f32
    %67 = vector.broadcast %cst_5 : f32 to vector<8x1xf32>
    %68 = arith.mulf %66, %67 : vector<8x1xf32>
    %69 = vector.broadcast %68 : vector<8x1xf32> to vector<8x128xf32>
    %70 = arith.cmpf ogt, %3, %69 : vector<8x128xf32>
    %71 = vector.extract_strided_slice %5 {offsets = [0, 6], sizes = [8, 1], strides = [1, 1]} : vector<8x16xf32> to vector<8x1xf32>
    %72 = vector.shape_cast %71 : vector<8x1xf32> to vector<8x1xf32>
    %73 = vector.broadcast %72 : vector<8x1xf32> to vector<8x128xf32>
    %74 = arith.select %70, %73, %63 : vector<8x128xi1>, vector<8x128xf32>
    %75 = vector.extract_strided_slice %5 {offsets = [0, 6], sizes = [8, 1], strides = [1, 1]} : vector<8x16xf32> to vector<8x1xf32>
    %76 = vector.extract_strided_slice %5 {offsets = [0, 7], sizes = [8, 1], strides = [1, 1]} : vector<8x16xf32> to vector<8x1xf32>
    %77 = arith.addf %75, %76 : vector<8x1xf32>
    %cst_6 = arith.constant 5.000000e-01 : f32
    %78 = vector.broadcast %cst_6 : f32 to vector<8x1xf32>
    %79 = arith.mulf %77, %78 : vector<8x1xf32>
    %80 = vector.broadcast %79 : vector<8x1xf32> to vector<8x128xf32>
    %81 = arith.cmpf ogt, %3, %80 : vector<8x128xf32>
    %82 = vector.extract_strided_slice %5 {offsets = [0, 7], sizes = [8, 1], strides = [1, 1]} : vector<8x16xf32> to vector<8x1xf32>
    %83 = vector.shape_cast %82 : vector<8x1xf32> to vector<8x1xf32>
    %84 = vector.broadcast %83 : vector<8x1xf32> to vector<8x128xf32>
    %85 = arith.select %81, %84, %74 : vector<8x128xi1>, vector<8x128xf32>
    %86 = vector.extract_strided_slice %5 {offsets = [0, 7], sizes = [8, 1], strides = [1, 1]} : vector<8x16xf32> to vector<8x1xf32>
    %87 = vector.extract_strided_slice %5 {offsets = [0, 8], sizes = [8, 1], strides = [1, 1]} : vector<8x16xf32> to vector<8x1xf32>
    %88 = arith.addf %86, %87 : vector<8x1xf32>
    %cst_7 = arith.constant 5.000000e-01 : f32
    %89 = vector.broadcast %cst_7 : f32 to vector<8x1xf32>
    %90 = arith.mulf %88, %89 : vector<8x1xf32>
    %91 = vector.broadcast %90 : vector<8x1xf32> to vector<8x128xf32>
    %92 = arith.cmpf ogt, %3, %91 : vector<8x128xf32>
    %93 = vector.extract_strided_slice %5 {offsets = [0, 8], sizes = [8, 1], strides = [1, 1]} : vector<8x16xf32> to vector<8x1xf32>
    %94 = vector.shape_cast %93 : vector<8x1xf32> to vector<8x1xf32>
    %95 = vector.broadcast %94 : vector<8x1xf32> to vector<8x128xf32>
    %96 = arith.select %92, %95, %85 : vector<8x128xi1>, vector<8x128xf32>
    %97 = vector.extract_strided_slice %5 {offsets = [0, 8], sizes = [8, 1], strides = [1, 1]} : vector<8x16xf32> to vector<8x1xf32>
    %98 = vector.extract_strided_slice %5 {offsets = [0, 9], sizes = [8, 1], strides = [1, 1]} : vector<8x16xf32> to vector<8x1xf32>
    %99 = arith.addf %97, %98 : vector<8x1xf32>
    %cst_8 = arith.constant 5.000000e-01 : f32
    %100 = vector.broadcast %cst_8 : f32 to vector<8x1xf32>
    %101 = arith.mulf %99, %100 : vector<8x1xf32>
    %102 = vector.broadcast %101 : vector<8x1xf32> to vector<8x128xf32>
    %103 = arith.cmpf ogt, %3, %102 : vector<8x128xf32>
    %104 = vector.extract_strided_slice %5 {offsets = [0, 9], sizes = [8, 1], strides = [1, 1]} : vector<8x16xf32> to vector<8x1xf32>
    %105 = vector.shape_cast %104 : vector<8x1xf32> to vector<8x1xf32>
    %106 = vector.broadcast %105 : vector<8x1xf32> to vector<8x128xf32>
    %107 = arith.select %103, %106, %96 : vector<8x128xi1>, vector<8x128xf32>
    %108 = vector.extract_strided_slice %5 {offsets = [0, 9], sizes = [8, 1], strides = [1, 1]} : vector<8x16xf32> to vector<8x1xf32>
    %109 = vector.extract_strided_slice %5 {offsets = [0, 10], sizes = [8, 1], strides = [1, 1]} : vector<8x16xf32> to vector<8x1xf32>
    %110 = arith.addf %108, %109 : vector<8x1xf32>
    %cst_9 = arith.constant 5.000000e-01 : f32
    %111 = vector.broadcast %cst_9 : f32 to vector<8x1xf32>
    %112 = arith.mulf %110, %111 : vector<8x1xf32>
    %113 = vector.broadcast %112 : vector<8x1xf32> to vector<8x128xf32>
    %114 = arith.cmpf ogt, %3, %113 : vector<8x128xf32>
    %115 = vector.extract_strided_slice %5 {offsets = [0, 10], sizes = [8, 1], strides = [1, 1]} : vector<8x16xf32> to vector<8x1xf32>
    %116 = vector.shape_cast %115 : vector<8x1xf32> to vector<8x1xf32>
    %117 = vector.broadcast %116 : vector<8x1xf32> to vector<8x128xf32>
    %118 = arith.select %114, %117, %107 : vector<8x128xi1>, vector<8x128xf32>
    %119 = vector.extract_strided_slice %5 {offsets = [0, 10], sizes = [8, 1], strides = [1, 1]} : vector<8x16xf32> to vector<8x1xf32>
    %120 = vector.extract_strided_slice %5 {offsets = [0, 11], sizes = [8, 1], strides = [1, 1]} : vector<8x16xf32> to vector<8x1xf32>
    %121 = arith.addf %119, %120 : vector<8x1xf32>
    %cst_10 = arith.constant 5.000000e-01 : f32
    %122 = vector.broadcast %cst_10 : f32 to vector<8x1xf32>
    %123 = arith.mulf %121, %122 : vector<8x1xf32>
    %124 = vector.broadcast %123 : vector<8x1xf32> to vector<8x128xf32>
    %125 = arith.cmpf ogt, %3, %124 : vector<8x128xf32>
    %126 = vector.extract_strided_slice %5 {offsets = [0, 11], sizes = [8, 1], strides = [1, 1]} : vector<8x16xf32> to vector<8x1xf32>
    %127 = vector.shape_cast %126 : vector<8x1xf32> to vector<8x1xf32>
    %128 = vector.broadcast %127 : vector<8x1xf32> to vector<8x128xf32>
    %129 = arith.select %125, %128, %118 : vector<8x128xi1>, vector<8x128xf32>
    %130 = vector.extract_strided_slice %5 {offsets = [0, 11], sizes = [8, 1], strides = [1, 1]} : vector<8x16xf32> to vector<8x1xf32>
    %131 = vector.extract_strided_slice %5 {offsets = [0, 12], sizes = [8, 1], strides = [1, 1]} : vector<8x16xf32> to vector<8x1xf32>
    %132 = arith.addf %130, %131 : vector<8x1xf32>
    %cst_11 = arith.constant 5.000000e-01 : f32
    %133 = vector.broadcast %cst_11 : f32 to vector<8x1xf32>
    %134 = arith.mulf %132, %133 : vector<8x1xf32>
    %135 = vector.broadcast %134 : vector<8x1xf32> to vector<8x128xf32>
    %136 = arith.cmpf ogt, %3, %135 : vector<8x128xf32>
    %137 = vector.extract_strided_slice %5 {offsets = [0, 12], sizes = [8, 1], strides = [1, 1]} : vector<8x16xf32> to vector<8x1xf32>
    %138 = vector.shape_cast %137 : vector<8x1xf32> to vector<8x1xf32>
    %139 = vector.broadcast %138 : vector<8x1xf32> to vector<8x128xf32>
    %140 = arith.select %136, %139, %129 : vector<8x128xi1>, vector<8x128xf32>
    %141 = vector.extract_strided_slice %5 {offsets = [0, 12], sizes = [8, 1], strides = [1, 1]} : vector<8x16xf32> to vector<8x1xf32>
    %142 = vector.extract_strided_slice %5 {offsets = [0, 13], sizes = [8, 1], strides = [1, 1]} : vector<8x16xf32> to vector<8x1xf32>
    %143 = arith.addf %141, %142 : vector<8x1xf32>
    %cst_12 = arith.constant 5.000000e-01 : f32
    %144 = vector.broadcast %cst_12 : f32 to vector<8x1xf32>
    %145 = arith.mulf %143, %144 : vector<8x1xf32>
    %146 = vector.broadcast %145 : vector<8x1xf32> to vector<8x128xf32>
    %147 = arith.cmpf ogt, %3, %146 : vector<8x128xf32>
    %148 = vector.extract_strided_slice %5 {offsets = [0, 13], sizes = [8, 1], strides = [1, 1]} : vector<8x16xf32> to vector<8x1xf32>
    %149 = vector.shape_cast %148 : vector<8x1xf32> to vector<8x1xf32>
    %150 = vector.broadcast %149 : vector<8x1xf32> to vector<8x128xf32>
    %151 = arith.select %147, %150, %140 : vector<8x128xi1>, vector<8x128xf32>
    %152 = vector.extract_strided_slice %5 {offsets = [0, 13], sizes = [8, 1], strides = [1, 1]} : vector<8x16xf32> to vector<8x1xf32>
    %153 = vector.extract_strided_slice %5 {offsets = [0, 14], sizes = [8, 1], strides = [1, 1]} : vector<8x16xf32> to vector<8x1xf32>
    %154 = arith.addf %152, %153 : vector<8x1xf32>
    %cst_13 = arith.constant 5.000000e-01 : f32
    %155 = vector.broadcast %cst_13 : f32 to vector<8x1xf32>
    %156 = arith.mulf %154, %155 : vector<8x1xf32>
    %157 = vector.broadcast %156 : vector<8x1xf32> to vector<8x128xf32>
    %158 = arith.cmpf ogt, %3, %157 : vector<8x128xf32>
    %159 = vector.extract_strided_slice %5 {offsets = [0, 14], sizes = [8, 1], strides = [1, 1]} : vector<8x16xf32> to vector<8x1xf32>
    %160 = vector.shape_cast %159 : vector<8x1xf32> to vector<8x1xf32>
    %161 = vector.broadcast %160 : vector<8x1xf32> to vector<8x128xf32>
    %162 = arith.select %158, %161, %151 : vector<8x128xi1>, vector<8x128xf32>
    %163 = vector.extract_strided_slice %5 {offsets = [0, 14], sizes = [8, 1], strides = [1, 1]} : vector<8x16xf32> to vector<8x1xf32>
    %164 = vector.extract_strided_slice %5 {offsets = [0, 15], sizes = [8, 1], strides = [1, 1]} : vector<8x16xf32> to vector<8x1xf32>
    %165 = arith.addf %163, %164 : vector<8x1xf32>
    %cst_14 = arith.constant 5.000000e-01 : f32
    %166 = vector.broadcast %cst_14 : f32 to vector<8x1xf32>
    %167 = arith.mulf %165, %166 : vector<8x1xf32>
    %168 = vector.broadcast %167 : vector<8x1xf32> to vector<8x128xf32>
    %169 = arith.cmpf ogt, %3, %168 : vector<8x128xf32>
    %170 = vector.extract_strided_slice %5 {offsets = [0, 15], sizes = [8, 1], strides = [1, 1]} : vector<8x16xf32> to vector<8x1xf32>
    %171 = vector.shape_cast %170 : vector<8x1xf32> to vector<8x1xf32>
    %172 = vector.broadcast %171 : vector<8x1xf32> to vector<8x128xf32>
    %173 = arith.select %169, %172, %162 : vector<8x128xi1>, vector<8x128xf32>
    %174 = arith.index_cast %1 : i32 to index
    %c0_15 = arith.constant 0 : index
    %175 = vector.load %arg3[%174, %c0_15] : memref<8x128xf32, #tpu.memory_space<vmem>>, vector<8x128xf32>
    tpu.vector_store %arg3[%174, %c0_15], %173 {strides = array<i32>} : memref<8x128xf32, #tpu.memory_space<vmem>>, vector<8x128xf32>,
    %c1_i32 = arith.constant 1 : i32
    return
  }
  func.func @transform_0(%arg0: i32) -> (i32, i32) {
    %c0_i32 = arith.constant 0 : i32
    %c0_i32_0 = arith.constant 0 : i32
    return %arg0, %c0_i32 : i32, i32
  }
  func.func @transform_1(%arg0: i32) -> (i32, i32) {
    %c0_i32 = arith.constant 0 : i32
    %c0_i32_0 = arith.constant 0 : i32
    return %arg0, %c0_i32 : i32, i32
  }
  func.func @transform_2(%arg0: i32) -> (i32, i32) {
    %c0_i32 = arith.constant 0 : i32
    %c0_i32_0 = arith.constant 0 : i32
    return %arg0, %c0_i32 : i32, i32
  }
}

</mosaic_0001>

<llo_original>
// kernel: tpu_custom_call.1
$region0: #{tpu_custom_call.1}
  #allocation0 [shape = 'u32[]', space=smem, size = 0x4, offset = 0x4, fixed_abs, tag = 'smem constant byte address 0x4 - core index']
  #allocation1 [shape = 'u32[144,128]{1,0:T(1,128)}', space=vmem, size = 0x12000, scoped, tag = 'internal scratch']
  %s0 = inlined_call_operand.hbm [shape: f32[16,128], index: 0, kind: input, shape index: {}]
  %s1 = inlined_call_operand.hbm [shape: f32[16,16], index: 1, kind: input, shape index: {}]
  %s2 = inlined_call_operand.hbm [shape: f32[16,128], index: 2, kind: output, shape index: {}]
  %s3 = sld [smem:[#allocation0]]
  $region49: #{tpu_custom_call.1} parent=0
    _
  %s5 = ssub.s32 1, %s3
  %s6 = scalar_select 0, %s5, %s3
  $region1: #{tpu_custom_call.1} parent=0
    #allocation2 [shape = 'u8[8192]{0}', space=vmem, size = 0x2000, scoped, tag = 'input window, operand 0']
    #allocation3 [shape = 's32[2]{0}', space=sflag, size = 0x8, scoped, tag = 'scoped memory for tpu_custom_call.1']
    #allocation4 [shape = 's32[2]{0}', space=sflag, size = 0x8, scoped, tag = 'scoped memory for tpu_custom_call.1']
    #allocation5 [shape = 'u8[8192]{0}', space=vmem, size = 0x2000, scoped, tag = 'input window, operand 1']
    #allocation6 [shape = 's32[2]{0}', space=sflag, size = 0x8, scoped, tag = 'scoped memory for tpu_custom_call.1']
    #allocation7 [shape = 'u8[8192]{0}', space=vmem, size = 0x2000, scoped, tag = 'output window, operand 0']
    %7 = vsyncpa [#allocation3], 0
    %s8 = scalar_lea.sflag [#allocation3], 1
    %9 = vsyncpa %s8, 0
    %10 = vsyncpa [#allocation6], 0
    %s11 = scalar_lea.sflag [#allocation6], 1
    %12 = vsyncpa %s11, 0
    %13 = vsyncpa [#allocation4], 0
    %s14 = scalar_lea.sflag [#allocation4], 1
    %15 = vsyncpa %s14, 0
    loop: start=0, step=1, limit=4
    $region2: #{tpu_custom_call.1} parent=1 // loop_pre_header
      _
    $region3: #{tpu_custom_call.1} parent=1 // loop_header
      %s17 = sphi 0, %s21
      %p18 = scmp.ge.s32.totalorder %s17, 4
      %s27 = sphi 0, %s29
      %s30 = sphi 0, %s27
      %s31 = sphi 0, %s30
      %s47 = sphi 0, %s31
      %s53 = sphi 0, %s55
      %s56 = sphi 0, %s53
      %s57 = sphi 0, %s56
      %s73 = sphi 0, %s57
      %s79 = sphi 0, %s81
      %s82 = sphi 0, %s79
      %s83 = sphi 0, %s82
      %s99 = sphi 0, %s83
    $region4: #{tpu_custom_call.1} parent=1 // loop_header_branch
      %20 = sbr.rel (%p18) target = $region8
    $region5: #{tpu_custom_call.1} parent=1 // loop_body
      %s22 = ssub.s32 %s17, 1
      %s23 = ssub.s32 %s17, 2
      %s24 = sadd.s32 %s17, 1
      %s25 = ssub.s32 %s17, %s24
      %p26 = scmp.eq.s32.totalorder %s25, 0
      %s28 = sadd.s32 %s27, 1
      %s29 = scalar_select %p26, %s27, %s28
      %p32 = pneg %p26
      %p33 = scmp.eq.s32.totalorder %s17, 1
      %p34 = por %p32, %p33
      %p35 = scmp.ne.s32.totalorder %s27, %s30
      %p36 = scmp.eq.s32.totalorder %s17, 0
      %p37 = por %p35, %p36
      %p38 = scmp.ne.s32.totalorder %s27, %s30
      %p39 = scmp.eq.s32.totalorder %s22, 1
      %p40 = por %p38, %p39
      %p41 = scmp.ne.s32.totalorder %s30, %s31
      %p42 = scmp.eq.s32.totalorder %s22, 0
      %p43 = por %p41, %p42
      %p44 = scmp.ne.s32.totalorder %s30, %s31
      %p45 = scmp.eq.s32.totalorder %s23, 1
      %p46 = por %p44, %p45
      %p48 = scmp.ne.s32.totalorder %s31, %s47
      %p49 = scmp.eq.s32.totalorder %s23, 0
      %p50 = por %p48, %p49
      %s51 = ssub.s32 %s17, %s24
      %p52 = scmp.eq.s32.totalorder %s51, 0
      %s54 = sadd.s32 %s53, 1
      %s55 = scalar_select %p52, %s53, %s54
      %p58 = pneg %p52
      %p59 = scmp.eq.s32.totalorder %s17, 1
      %p60 = por %p58, %p59
      %p61 = scmp.ne.s32.totalorder %s53, %s56
      %p62 = scmp.eq.s32.totalorder %s17, 0
      %p63 = por %p61, %p62
      %p64 = scmp.ne.s32.totalorder %s53, %s56
      %p65 = scmp.eq.s32.totalorder %s22, 1
      %p66 = por %p64, %p65
      %p67 = scmp.ne.s32.totalorder %s56, %s57
      %p68 = scmp.eq.s32.totalorder %s22, 0
      %p69 = por %p67, %p68
      %p70 = scmp.ne.s32.totalorder %s56, %s57
      %p71 = scmp.eq.s32.totalorder %s23, 1
      %p72 = por %p70, %p71
      %p74 = scmp.ne.s32.totalorder %s57, %s73
      %p75 = scmp.eq.s32.totalorder %s23, 0
      %p76 = por %p74, %p75
      %s77 = ssub.s32 %s17, %s24
      %p78 = scmp.eq.s32.totalorder %s77, 0
      %s80 = sadd.s32 %s79, 1
      %s81 = scalar_select %p78, %s79, %s80
      %p84 = pneg %p78
      %p85 = scmp.eq.s32.totalorder %s17, 1
      %p86 = por %p84, %p85
      %p87 = scmp.ne.s32.totalorder %s79, %s82
      %p88 = scmp.eq.s32.totalorder %s17, 0
      %p89 = por %p87, %p88
      %p90 = scmp.ne.s32.totalorder %s79, %s82
      %p91 = scmp.eq.s32.totalorder %s22, 1
      %p92 = por %p90, %p91
      %p93 = scmp.ne.s32.totalorder %s82, %s83
      %p94 = scmp.eq.s32.totalorder %s22, 0
      %p95 = por %p93, %p94
      %p96 = scmp.ne.s32.totalorder %s82, %s83
      %p97 = scmp.eq.s32.totalorder %s23, 1
      %p98 = por %p96, %p97
      %p100 = scmp.ne.s32.totalorder %s83, %s99
      %p101 = scmp.eq.s32.totalorder %s23, 0
      %p102 = por %p100, %p101
      %p103 = scmp.le.s32.totalorder 1, %s17
      %p104 = scmp.lt.s32.totalorder %s17, 3
      %p105 = pnand %p103, %p104
      %p106 = pneg %p105
      // Predicated region
      $region9: #{tpu_custom_call.1} parent=5 // pred_check
        _
      $region10: #{tpu_custom_call.1} parent=5 // pred_check_branch
        %108 = sbr.rel (%p105) target = $region12
      $region11: #{tpu_custom_call.1} parent=5 // pred_region
        %s109 = ssub.s32 %s17, 1
      $region12: #{tpu_custom_call.1} parent=5 // pred_fallthru
        _
      %p110 = scmp.lt.s32.totalorder %s17, 2
      // Predicated region
      $region13: #{tpu_custom_call.1} parent=5 // pred_check
        %p111 = pneg %p110
      $region14: #{tpu_custom_call.1} parent=5 // pred_check_branch
        %113 = sbr.rel (%p111) target = $region16
      $region15: #{tpu_custom_call.1} parent=5 // pred_region
        // Predicated region
        $region17: #{tpu_custom_call.1} parent=15 // pred_check
          %p114 = pneg %p37
        $region18: #{tpu_custom_call.1} parent=15 // pred_check_branch
          %116 = sbr.rel (%p114) target = $region20
        $region19: #{tpu_custom_call.1} parent=15 // pred_region
          %s117 = sand.u32 %s27, 1
          %s118 = scalar_lea.sflag [#allocation3], %s117
          %s119 = sand.u32 %s27, 1
          %s120 = smul.addr %s119, 8
          %s121 = scalar_lea.vmem [#allocation2], %s120
          %s123 = ssub.s32 128, 128
          %124 = vsyncadd %s118, %s123
          %s125 = smul.addr %s17, 128
          %s126 = scalar_lea.hbm %s0, %s125
          %s128 = sshll.u32 %s121, 4
          %s129 = int_to_ptr.vmem [resolvable:$true] %s128
          %131 = dma.hbm_to_vmem [thread:$0]  %s126, 128, %s129, %s118
        $region20: #{tpu_custom_call.1} parent=15 // pred_fallthru
          _
        // Predicated region
        $region21: #{tpu_custom_call.1} parent=15 // pred_check
          %p132 = pneg %p63
        $region22: #{tpu_custom_call.1} parent=15 // pred_check_branch
          %134 = sbr.rel (%p132) target = $region24
        $region23: #{tpu_custom_call.1} parent=15 // pred_region
          %s135 = sand.u32 %s53, 1
          %s136 = scalar_lea.sflag [#allocation6], %s135
          %s137 = sand.u32 %s53, 1
          %s138 = smul.addr %s137, 8
          %s139 = scalar_lea.vmem [#allocation5], %s138
          %s141 = ssub.s32 128, 128
          %142 = vsyncadd %s136, %s141
          %s143 = smul.addr %s17, 128
          %s144 = scalar_lea.hbm %s1, %s143
          %s146 = sshll.u32 %s139, 4
          %s147 = int_to_ptr.vmem [resolvable:$true] %s146
          %149 = dma.hbm_to_vmem [thread:$0]  %s144, 128, %s147, %s136
        $region24: #{tpu_custom_call.1} parent=15 // pred_fallthru
          _
      $region16: #{tpu_custom_call.1} parent=5 // pred_fallthru
        _
      %p150 = scmp.le.s32.totalorder 1, %s17
      %p151 = scmp.lt.s32.totalorder %s17, 3
      %p152 = pnand %p150, %p151
      %p153 = pneg %p152
      // Predicated region
      $region25: #{tpu_custom_call.1} parent=5 // pred_check
        _
      $region26: #{tpu_custom_call.1} parent=5 // pred_check_branch
        %155 = sbr.rel (%p152) target = $region28
      $region27: #{tpu_custom_call.1} parent=5 // pred_region
        %s156 = ssub.s32 %s17, 1
        %s157 = sand.u32 %s30, 1
        %s158 = scalar_lea.sflag [#allocation3], %s157
        %s159 = sand.u32 %s30, 1
        %s160 = smul.addr %s159, 8
        %s161 = scalar_lea.vmem [#allocation2], %s160
        // Predicated region
        $region29: #{tpu_custom_call.1} parent=27 // pred_check
          %p162 = pneg %p43
        $region30: #{tpu_custom_call.1} parent=27 // pred_check_branch
          %164 = sbr.rel (%p162) target = $region32
        $region31: #{tpu_custom_call.1} parent=27 // pred_region
          %165 = dma.done %s158, 128
        $region32: #{tpu_custom_call.1} parent=27 // pred_fallthru
          _
        %s166 = sand.u32 %s56, 1
        %s167 = scalar_lea.sflag [#allocation6], %s166
        %s168 = sand.u32 %s56, 1
        %s169 = smul.addr %s168, 8
        %s170 = scalar_lea.vmem [#allocation5], %s169
        // Predicated region
        $region33: #{tpu_custom_call.1} parent=27 // pred_check
          %p171 = pneg %p69
        $region34: #{tpu_custom_call.1} parent=27 // pred_check_branch
          %173 = sbr.rel (%p171) target = $region36
        $region35: #{tpu_custom_call.1} parent=27 // pred_region
          %174 = dma.done %s167, 128
        $region36: #{tpu_custom_call.1} parent=27 // pred_fallthru
          _
        %s175 = sand.u32 %s30, 1
        %s176 = scalar_lea.sflag [#allocation3], %s175
        %s177 = sand.u32 %s30, 1
        %s178 = smul.addr %s177, 8
        %s179 = scalar_lea.vmem [#allocation2], %s178
        %p180 = pneg %p43
        %p181 = pneg %p40
        %s182 = sand.u32 %s56, 1
        %s183 = scalar_lea.sflag [#allocation6], %s182
        %s184 = sand.u32 %s56, 1
        %s185 = smul.addr %s184, 8
        %s186 = scalar_lea.vmem [#allocation5], %s185
        %p187 = pneg %p69
        %p188 = pneg %p66
        %p189 = pneg %p95
        %p190 = pneg %p92
        %s191 = sand.u32 %s82, 1
        %s192 = scalar_lea.sflag [#allocation4], %s191
        %s193 = sand.u32 %s82, 1
        %s194 = smul.addr %s193, 8
        %s195 = scalar_lea.vmem [#allocation7], %s194
        %v196 = vld [vmem:[%s161] sm:$0xff]
        %v197 = vld [vmem:[%s170] sm:$0xff]
        %199 = vset.pattern.permute.xlu0 0
        %200 = vperm.xlu0 %199, %v197
        %v201 = vpop.permute.xlu0 %200
        %203 = vrot.lane.b32.xlu0 %v197, 127
        %v204 = vpop.permute.xlu0 %203
        %v206 = vadd.f32 %v197, %v204
        %v207 = vmul.f32 %v206, 0.5
        %209 = vset.pattern.permute.xlu0 0
        %210 = vperm.xlu0 %209, %v207
        %v211 = vpop.permute.xlu0 %210
        %vm213 = vcmp.gt.f32.partialorder %v196, %v211
        %214 = vset.pattern.permute.xlu0 1
        %215 = vperm.xlu0 %214, %v197
        %v216 = vpop.permute.xlu0 %215
        %v218 = vsel %vm213, %v216, %v201
        %219 = vset.pattern.permute.xlu0 1
        %220 = vperm.xlu0 %219, %v207
        %v221 = vpop.permute.xlu0 %220
        %vm223 = vcmp.gt.f32.partialorder %v196, %v221
        %224 = vset.pattern.permute.xlu0 2
        %225 = vperm.xlu0 %224, %v197
        %v226 = vpop.permute.xlu0 %225
        %v228 = vsel %vm223, %v226, %v218
        %229 = vset.pattern.permute.xlu0 2
        %230 = vperm.xlu0 %229, %v207
        %v231 = vpop.permute.xlu0 %230
        %vm233 = vcmp.gt.f32.partialorder %v196, %v231
        %234 = vset.pattern.permute.xlu0 3
        %235 = vperm.xlu0 %234, %v197
        %v236 = vpop.permute.xlu0 %235
        %v238 = vsel %vm233, %v236, %v228
        %239 = vset.pattern.permute.xlu0 3
        %240 = vperm.xlu0 %239, %v207
        %v241 = vpop.permute.xlu0 %240
        %vm243 = vcmp.gt.f32.partialorder %v196, %v241
        %244 = vset.pattern.permute.xlu0 4
        %245 = vperm.xlu0 %244, %v197
        %v246 = vpop.permute.xlu0 %245
        %v248 = vsel %vm243, %v246, %v238
        %249 = vset.pattern.permute.xlu0 4
        %250 = vperm.xlu0 %249, %v207
        %v251 = vpop.permute.xlu0 %250
        %vm253 = vcmp.gt.f32.partialorder %v196, %v251
        %254 = vset.pattern.permute.xlu0 5
        %255 = vperm.xlu0 %254, %v197
        %v256 = vpop.permute.xlu0 %255
        %v258 = vsel %vm253, %v256, %v248
        %259 = vset.pattern.permute.xlu0 5
        %260 = vperm.xlu0 %259, %v207
        %v261 = vpop.permute.xlu0 %260
        %vm263 = vcmp.gt.f32.partialorder %v196, %v261
        %264 = vset.pattern.permute.xlu0 6
        %265 = vperm.xlu0 %264, %v197
        %v266 = vpop.permute.xlu0 %265
        %v268 = vsel %vm263, %v266, %v258
        %269 = vset.pattern.permute.xlu0 6
        %270 = vperm.xlu0 %269, %v207
        %v271 = vpop.permute.xlu0 %270
        %vm273 = vcmp.gt.f32.partialorder %v196, %v271
        %274 = vset.pattern.permute.xlu0 7
        %275 = vperm.xlu0 %274, %v197
        %v276 = vpop.permute.xlu0 %275
        %v278 = vsel %vm273, %v276, %v268
        %279 = vset.pattern.permute.xlu0 7
        %280 = vperm.xlu0 %279, %v207
        %v281 = vpop.permute.xlu0 %280
        %vm283 = vcmp.gt.f32.partialorder %v196, %v281
        %284 = vset.pattern.permute.xlu0 8
        %285 = vperm.xlu0 %284, %v197
        %v286 = vpop.permute.xlu0 %285
        %v288 = vsel %vm283, %v286, %v278
        %289 = vset.pattern.permute.xlu0 8
        %290 = vperm.xlu0 %289, %v207
        %v291 = vpop.permute.xlu0 %290
        %vm293 = vcmp.gt.f32.partialorder %v196, %v291
        %294 = vset.pattern.permute.xlu0 9
        %295 = vperm.xlu0 %294, %v197
        %v296 = vpop.permute.xlu0 %295
        %v298 = vsel %vm293, %v296, %v288
        %299 = vset.pattern.permute.xlu0 9
        %300 = vperm.xlu0 %299, %v207
        %v301 = vpop.permute.xlu0 %300
        %vm303 = vcmp.gt.f32.partialorder %v196, %v301
        %304 = vset.pattern.permute.xlu0 10
        %305 = vperm.xlu0 %304, %v197
        %v306 = vpop.permute.xlu0 %305
        %v308 = vsel %vm303, %v306, %v298
        %309 = vset.pattern.permute.xlu0 10
        %310 = vperm.xlu0 %309, %v207
        %v311 = vpop.permute.xlu0 %310
        %vm313 = vcmp.gt.f32.partialorder %v196, %v311
        %314 = vset.pattern.permute.xlu0 11
        %315 = vperm.xlu0 %314, %v197
        %v316 = vpop.permute.xlu0 %315
        %v318 = vsel %vm313, %v316, %v308
        %319 = vset.pattern.permute.xlu0 11
        %320 = vperm.xlu0 %319, %v207
        %v321 = vpop.permute.xlu0 %320
        %vm323 = vcmp.gt.f32.partialorder %v196, %v321
        %324 = vset.pattern.permute.xlu0 12
        %325 = vperm.xlu0 %324, %v197
        %v326 = vpop.permute.xlu0 %325
        %v328 = vsel %vm323, %v326, %v318
        %329 = vset.pattern.permute.xlu0 12
        %330 = vperm.xlu0 %329, %v207
        %v331 = vpop.permute.xlu0 %330
        %vm333 = vcmp.gt.f32.partialorder %v196, %v331
        %334 = vset.pattern.permute.xlu0 13
        %335 = vperm.xlu0 %334, %v197
        %v336 = vpop.permute.xlu0 %335
        %v338 = vsel %vm333, %v336, %v328
        %339 = vset.pattern.permute.xlu0 13
        %340 = vperm.xlu0 %339, %v207
        %v341 = vpop.permute.xlu0 %340
        %vm343 = vcmp.gt.f32.partialorder %v196, %v341
        %344 = vset.pattern.permute.xlu0 14
        %345 = vperm.xlu0 %344, %v197
        %v346 = vpop.permute.xlu0 %345
        %v348 = vsel %vm343, %v346, %v338
        %349 = vset.pattern.permute.xlu0 14
        %350 = vperm.xlu0 %349, %v207
        %v351 = vpop.permute.xlu0 %350
        %vm353 = vcmp.gt.f32.partialorder %v196, %v351
        %354 = vset.pattern.permute.xlu0 15
        %355 = vperm.xlu0 %354, %v197
        %v356 = vpop.permute.xlu0 %355
        %v358 = vsel %vm353, %v356, %v348
        %359 = vst [vmem:[%s195] sm:$0xff] %v358
        %s360 = sand.u32 %s82, 1
        %s361 = scalar_lea.sflag [#allocation4], %s360
        %s362 = sand.u32 %s82, 1
        %s363 = smul.addr %s362, 8
        %s364 = scalar_lea.vmem [#allocation7], %s363
        // Predicated region
        $region37: #{tpu_custom_call.1} parent=27 // pred_check
          %p365 = pneg %p92
        $region38: #{tpu_custom_call.1} parent=27 // pred_check_branch
          %367 = sbr.rel (%p365) target = $region40
        $region39: #{tpu_custom_call.1} parent=27 // pred_region
          %s369 = ssub.s32 128, 128
          %370 = vsyncadd %s361, %s369
          %s371 = smul.addr %s22, 128
          %s372 = scalar_lea.hbm %s2, %s371
          %s374 = sshll.u32 %s364, 4
          %s375 = int_to_ptr.vmem [resolvable:$true] %s374
          %377 = dma.vmem_to_hbm [thread:$0]  %s375, 128, %s372, %s361
        $region40: #{tpu_custom_call.1} parent=27 // pred_fallthru
          _
      $region28: #{tpu_custom_call.1} parent=5 // pred_fallthru
        _
      %p378 = scmp.le.s32.totalorder 2, %s17
      // Predicated region
      $region41: #{tpu_custom_call.1} parent=5 // pred_check
        %p379 = pneg %p378
      $region42: #{tpu_custom_call.1} parent=5 // pred_check_branch
        %381 = sbr.rel (%p379) target = $region44
      $region43: #{tpu_custom_call.1} parent=5 // pred_region
        %s382 = ssub.s32 %s17, 2
        // Predicated region
        $region45: #{tpu_custom_call.1} parent=43 // pred_check
          %p383 = pneg %p98
        $region46: #{tpu_custom_call.1} parent=43 // pred_check_branch
          %385 = sbr.rel (%p383) target = $region48
        $region47: #{tpu_custom_call.1} parent=43 // pred_region
          %s386 = sand.u32 %s83, 1
          %s387 = scalar_lea.sflag [#allocation4], %s386
          %s388 = sand.u32 %s83, 1
          %s389 = smul.addr %s388, 8
          %s390 = scalar_lea.vmem [#allocation7], %s389
          %391 = dma.done %s387, 128
        $region48: #{tpu_custom_call.1} parent=43 // pred_fallthru
          _
      $region44: #{tpu_custom_call.1} parent=5 // pred_fallthru
        _
    $region6: #{tpu_custom_call.1} parent=1 // loop_footer
      %s21 = sadd.s32 1, %s17
    $region7: #{tpu_custom_call.1} parent=1 // loop_footer_branch
      %16 = sbr.rel target = $region3
    $region8: #{tpu_custom_call.1} parent=1 // loop_exit
      _
    %392 = vsyncpa [#allocation3], 1
    %s393 = scalar_lea.sflag [#allocation3], 1
    %394 = vsyncpa %s393, 1
    %395 = vsyncpa [#allocation6], 1
    %s396 = scalar_lea.sflag [#allocation6], 1
    %397 = vsyncpa %s396, 1
    %398 = vsyncpa [#allocation4], 1
    %s399 = scalar_lea.sflag [#allocation4], 1
    %400 = vsyncpa %s399, 1

</llo_original>
